<compile_context>
chip_gen: v7x
topology: tpu7x:2x2x1
jax: 0.10.0
libtpu: 0.0.40
codegen_flags: <defaults>
</compile_context>

<pallas_src>
import functools
import math

import jax
import jax.numpy as jnp
from jax.experimental import pallas as pl
from jax.experimental.pallas import tpu as pltpu


# ----------------------------- fused kernel --------------------------------
def _tc_block_fused_kernel(x_ref, b_ref, *refs, dilations, c_in, c_in_pad,
                           filters, seq_len, matmul_dtype):
    """One grid step = `bt` whole sequences (M = bt*T rows).

    x_ref : (M, C_in)           input rows for this step (x.dtype)
    b_ref : (L, 2F)             all level biases, f32, resident VMEM
    refs  : w_0 .. w_{L-1}      packed level weights, resident VMEM:
                                (C_in_pad + l*F, 4F) = [w1f|w1g|w0f|w0g]
                                (or (.., 2F) = [w1f|w1g] when dilation >= T)
            out_ref (M, C_in + L*F)      output rows (x.dtype)
            slab    (M, C_in_pad + L*F)  VMEM scratch, matmul_dtype: the
                                         growing channel slab / matmul LHS.
    """
    L = len(dilations)
    w_refs = refs[:L]
    out_ref = refs[L]
    slab = refs[L + 1]
    M = out_ref.shape[0]
    F = filters
    F2 = 2 * F

    # Seed the slab (matmul_dtype) and the output (x.dtype) with the input.
    x = x_ref[...]
    out_ref[:, 0:c_in] = x
    slab[:, 0:c_in] = x.astype(matmul_dtype)
    if c_in_pad > c_in:                      # lane-alignment padding columns
        slab[:, c_in:c_in_pad] = jnp.zeros((M, c_in_pad - c_in), matmul_dtype)

    # Causal position of each row inside its own sequence (row tiles hold
    # whole sequences, so row % T is the time index).
    t_idx = jax.lax.broadcasted_iota(jnp.int32, (M, 1), 0) % seq_len

    c_lhs = c_in_pad          # read width in the (padded) slab
    c_out = c_in              # write offset in the (unpadded) output
    for lvl, d in enumerate(dilations):
        # Single fused matmul: N = 4F (2F when the shifted tap vanishes).
        pre = jnp.dot(slab[:, 0:c_lhs], w_refs[lvl][...],
                      preferred_element_type=jnp.float32)
        fg = pre[:, 0:F2]                                  # current tap
        if d < seq_len:
            # Shifted tap: roll/mask AFTER the matmul (commutes with the
            # channel contraction).  Rows with t < d are zeroed, which also
            # kills any wrap across sequence / batch / tile boundaries.
            sh = jnp.roll(pre[:, F2:2 * F2], d, axis=0)
            fg = fg + jnp.where(t_idx >= d, sh, 0.0)
        # else: x[t-d] == 0 for every row -> shifted tap skipped entirely.

        fg = fg + b_ref[lvl:lvl + 1, :].astype(jnp.float32)
        f_act = jnp.tanh(fg[:, 0:F])
        # sigmoid via tanh: one EUP push per element instead of exp + recip.
        g_act = 0.5 * (jnp.tanh(0.5 * fg[:, F:F2]) + 1.0)
        act = f_act * g_act                                # (M, F), f32

        slab[:, c_lhs:c_lhs + F] = act.astype(matmul_dtype)
        out_ref[:, c_out:c_out + F] = act.astype(out_ref.dtype)
        c_lhs += F
        c_out += F


# --------------------------- one-time weight prep ---------------------------
def _round_up(v, m):
    return ((v + m - 1) // m) * m


def pack_tc_block_params(blocks, in_channels, seq_length, *,
                         matmul_dtype=jnp.bfloat16, c_in_align=128):
    """One-time weight prep (hoisted out of the forward pass).

    Per level, packs [w1f|w1g|w0f|w0g] into one (C_l_pad, 4F) matrix in
    matmul_dtype (2F when dilation >= seq_length), inserts zero rows for the
    lane-alignment padding of C_in, and stacks biases into one (L, 2F) f32
    array.
    """
    F = int(blocks[0][1]["w1f"].shape[1])
    c_in = int(in_channels)
    c_in_pad = _round_up(c_in, c_in_align) if c_in_align else c_in
    pad = c_in_pad - c_in

    w_list, b_rows, dilations = [], [], []
    for d, p in blocks:
        d = int(d)
        dilations.append(d)
        if d < seq_length:
            w = jnp.concatenate([p["w1f"], p["w1g"], p["w0f"], p["w0g"]],
                                axis=1)
        else:                  # x[t-d] == 0 everywhere: drop the shifted tap
            w = jnp.concatenate([p["w1f"], p["w1g"]], axis=1)
        if pad:                # zero rows for the padded input columns
            w = jnp.concatenate(
                [w[:c_in], jnp.zeros((pad, w.shape[1]), w.dtype), w[c_in:]],
                axis=0)
        w_list.append(w.astype(matmul_dtype))
        b_rows.append(jnp.concatenate([p["bf"], p["bg"]], axis=1))
    b_all = jnp.concatenate(b_rows, axis=0).astype(jnp.float32)   # (L, 2F)

    return dict(w=tuple(w_list), b=b_all, dilations=tuple(dilations),
                c_in=c_in, c_in_pad=c_in_pad, filters=F,
                seq_len=int(seq_length), matmul_dtype=matmul_dtype)


# ------------------------------ wrapper ------------------------------------
def _pick_batch_tile(batch, seq_len, *, target_rows=1024, min_steps=4):
    """Pick bt | batch: keep >= min_steps grid steps when possible
    (pipelining + both v7x TensorCores), rows-per-step near target_rows,
    sublane-aligned rows preferred."""
    best_key, best_bt = None, 1
    for bt in range(1, batch + 1):
        if batch % bt:
            continue
        steps = batch // bt
        rows = bt * seq_len
        key = (max(0, min_steps - steps),
               abs(math.log(rows / target_rows)),
               rows % 8 != 0)
        if best_key is None or key < best_key:
            best_key, best_bt = key, bt
    return best_bt


def tc_block_forward(x, packed, *, batch_tile=None, vmem_limit_bytes=None):
    """TCBlock forward. x: (B, T, C_in) -> (B, T, C_in + L*filters)."""
    B, T, C_in = x.shape
    assert C_in == packed["c_in"], "channel mismatch vs packed params"
    assert T == packed["seq_len"], "seq_length mismatch vs packed params"
    dilations = packed["dilations"]
    L = len(dilations)
    F = packed["filters"]
    c_in_pad = packed["c_in_pad"]
    matmul_dtype = packed["matmul_dtype"]
    C_total = C_in + L * F
    c_slab = c_in_pad + L * F

    bt = _pick_batch_tile(B, T) if batch_tile is None else batch_tile
    assert B % bt == 0, "batch_tile must divide the batch size"
    R = bt * T                       # rows (sublanes) per grid step
    steps = B // bt

    kernel = functools.partial(
        _tc_block_fused_kernel, dilations=dilations, c_in=C_in,
        c_in_pad=c_in_pad, filters=F, seq_len=T, matmul_dtype=matmul_dtype)

    # Weights / biases as whole-array VMEM operands: DMA'd once, resident and
    # single-buffered for the whole call (no per-step double buffering).
    in_specs = [pl.BlockSpec((R, C_in), lambda i: (i, 0))]
    in_specs += [pl.BlockSpec(memory_space=pltpu.MemorySpace.VMEM)
                 for _ in range(L + 1)]

    # Advisory cost hint so XLA schedules/overlaps the custom call sensibly.
    flops = 0
    for lvl, d in enumerate(dilations):
        k = c_in_pad + lvl * F
        n = 4 * F if d < T else 2 * F
        flops += 2 * B * T * k * n
    transcendentals = 2 * B * T * F * L
    w_bytes = sum(int(w.size) * w.dtype.itemsize for w in packed["w"])
    w_bytes += int(packed["b"].size) * packed["b"].dtype.itemsize
    bytes_accessed = (int(x.size) * x.dtype.itemsize + w_bytes
                      + B * T * C_total * x.dtype.itemsize)

    # VMEM budget: 2x in/out pipeline buffers + resident weights + the
    # matmul_dtype slab scratch + per-level f32 temporaries.  Only raise the
    # scoped limit when the estimate exceeds the smallest default (v5e,
    # 16 MiB); cap at v7x's 64 MiB physical (shrink batch_tile past that).
    if vmem_limit_bytes is None:
        mm_isz = jnp.dtype(matmul_dtype).itemsize
        out_isz = x.dtype.itemsize
        est = (2 * R * C_in * out_isz + 2 * R * C_total * out_isz
               + R * c_slab * mm_isz + w_bytes + 3 * R * 4 * F * 4)
        if est > (16 << 20):
            vmem_limit_bytes = min(int(est * 1.25) + (2 << 20), 64 << 20)

    out2d = pl.pallas_call(
        kernel,
        out_shape=jax.ShapeDtypeStruct((B * T, C_total), x.dtype),
        grid_spec=pltpu.PrefetchScalarGridSpec(
            num_scalar_prefetch=0,
            grid=(steps,),
            in_specs=in_specs,
            out_specs=pl.BlockSpec((R, C_total), lambda i: (i, 0)),
            scratch_shapes=[pltpu.VMEM((R, c_slab), matmul_dtype)],
        ),
        compiler_params=pltpu.CompilerParams(
            dimension_semantics=("parallel",),
            vmem_limit_bytes=vmem_limit_bytes),
        cost_estimate=pl.CostEstimate(
            flops=int(flops), transcendentals=int(transcendentals),
            bytes_accessed=int(bytes_accessed)),
    )(x.reshape(B * T, C_in), packed["b"], *packed["w"])

    return out2d.reshape(B, T, C_total)


# --------------------------- parameter init --------------------------------
def init_tc_block(key, in_channels, seq_length, filters):
    """Deterministic parameter init matching TCBlock.__init__ shapes."""
    n_blocks = int(math.ceil(math.log(seq_length, 2)))
    blocks = []
    c = in_channels
    for i in range(n_blocks):
        dilation = 2 ** (i + 1)
        key, *ks = jax.random.split(key, 7)
        scale = 1.0 / math.sqrt(c * 2)   # fan_in = in_channels * kernel_size

        def u(k, shape):
            return jax.random.uniform(k, shape, jnp.float32, -scale, scale)

        params = {
            "w0f": u(ks[0], (c, filters)),   # tap applied to x[t-d]
            "w1f": u(ks[1], (c, filters)),   # tap applied to x[t]
            "bf":  u(ks[2], (1, filters)),
            "w0g": u(ks[3], (c, filters)),
            "w1g": u(ks[4], (c, filters)),
            "bg":  u(ks[5], (1, filters)),
        }
        blocks.append((dilation, params))
        c += filters
    return blocks


# ---- pure-JAX reference (mirrors the PyTorch semantics) --------------------
def _ref_causal_conv(x, w0, w1, b, d):
    B, T, C = x.shape
    x_shift = jnp.pad(x, ((0, 0), (d, 0), (0, 0)))[:, :T, :]
    return (jnp.einsum("btc,cf->btf", x_shift, w0)
            + jnp.einsum("btc,cf->btf", x, w1) + b)


def tc_block_ref(x, blocks):
    for d, p in blocks:
        xf = _ref_causal_conv(x, p["w0f"], p["w1f"], p["bf"], d)
        xg = _ref_causal_conv(x, p["w0g"], p["w1g"], p["bg"], d)
        act = jnp.tanh(xf) * jax.nn.sigmoid(xg)
        x = jnp.concatenate([x, act], axis=2)
    return x


if __name__ == "__main__":
    B, T, C_IN, FILTERS = 2, 8, 4, 4

    key = jax.random.PRNGKey(0)
    k_x, k_p = jax.random.split(key)
    x = jax.random.normal(k_x, (B, T, C_IN), jnp.float32)

    blocks = init_tc_block(k_p, C_IN, seq_length=T, filters=FILTERS)
    ref = tc_block_ref(x, blocks)
    C_OUT = C_IN + len(blocks) * FILTERS

    # f32 matmul path: bit-faithful to the PyTorch module.
    packed_f32 = pack_tc_block_params(blocks, C_IN, T,
                                      matmul_dtype=jnp.float32)
    out_f32 = jax.block_until_ready(tc_block_forward(x, packed_f32))
    assert out_f32.shape == (B, T, C_OUT), out_f32.shape
    assert jnp.allclose(out_f32, ref, rtol=1e-5, atol=1e-5), "f32 mismatch"

    # Default production path: bf16 matmul operands + bf16 slab storage,
    # f32 accumulation and f32 bias / activation math.
    packed_bf16 = pack_tc_block_params(blocks, C_IN, T)   # bf16 default
    out_bf16 = jax.block_until_ready(tc_block_forward(x, packed_bf16))
    assert out_bf16.shape == (B, T, C_OUT), out_bf16.shape
    assert jnp.allclose(out_bf16, ref, rtol=5e-2, atol=5e-2), "bf16 drifted"

    print("KERNEL_OK")
</pallas_src>

<mosaic_0001>
module attributes {stable_mosaic.version = 11 : i64} {
  func.func @_tc_block_fused_kernel(%arg0: i32, %arg1: memref<8x4xf32, #tpu.memory_space<vmem>>, %arg2: memref<3x8xf32, #tpu.memory_space<vmem>>, %arg3: memref<128x16xf32, #tpu.memory_space<vmem>>, %arg4: memref<132x16xf32, #tpu.memory_space<vmem>>, %arg5: memref<136x8xf32, #tpu.memory_space<vmem>>, %arg6: memref<8x16xf32, #tpu.memory_space<vmem>>, %arg7: memref<8x140xf32, #tpu.memory_space<vmem>>) attributes {dimension_semantics = [#tpu.dimension_semantics<parallel>], iteration_bounds = array<i64: 2>, scalar_prefetch = 0 : i64, scratch_operands = 1 : i64, tpu.core_type = #tpu.core_type<tc>, window_params = [{transform_indices = @transform_0, window_bounds = array<i64: 8, 4>}, {pipeline_mode = #tpu.pipeline_mode<synchronous>, transform_indices = @transform_1, window_bounds = array<i64: 3, 8>}, {pipeline_mode = #tpu.pipeline_mode<synchronous>, transform_indices = @transform_2, window_bounds = array<i64: 128, 16>}, {pipeline_mode = #tpu.pipeline_mode<synchronous>, transform_indices = @transform_3, window_bounds = array<i64: 132, 16>}, {pipeline_mode = #tpu.pipeline_mode<synchronous>, transform_indices = @transform_4, window_bounds = array<i64: 136, 8>}, {transform_indices = @transform_5, window_bounds = array<i64: 8, 16>}]} {
    %c0 = arith.constant 0 : index
    %c0_0 = arith.constant 0 : index
    %0 = vector.load %arg1[%c0, %c0_0] : memref<8x4xf32, #tpu.memory_space<vmem>>, vector<8x4xf32>
    %c0_1 = arith.constant 0 : index
    %c0_2 = arith.constant 0 : index
    %1 = vector.load %arg6[%c0_1, %c0_2] : memref<8x16xf32, #tpu.memory_space<vmem>>, vector<8x4xf32>
    tpu.vector_store %arg6[%c0_1, %c0_2], %0 {strides = array<i32>} : memref<8x16xf32, #tpu.memory_space<vmem>>, vector<8x4xf32>,
    %c0_3 = arith.constant 0 : index
    %c0_4 = arith.constant 0 : index
    %2 = vector.load %arg7[%c0_3, %c0_4] : memref<8x140xf32, #tpu.memory_space<vmem>>, vector<8x4xf32>
    tpu.vector_store %arg7[%c0_3, %c0_4], %0 {strides = array<i32>} : memref<8x140xf32, #tpu.memory_space<vmem>>, vector<8x4xf32>,
    %cst = arith.constant 0.000000e+00 : f32
    %3 = vector.broadcast %cst : f32 to vector<8x124xf32>
    %c0_5 = arith.constant 0 : index
    %c4 = arith.constant 4 : index
    %4 = vector.load %arg7[%c0_5, %c4] : memref<8x140xf32, #tpu.memory_space<vmem>>, vector<8x124xf32>
    tpu.vector_store %arg7[%c0_5, %c4], %3 {strides = array<i32>} : memref<8x140xf32, #tpu.memory_space<vmem>>, vector<8x124xf32>,
    %5 = tpu.iota {dimensions = array<i32: 0>} : vector<8x1xi32>
    %c8_i32 = arith.constant 8 : i32
    %c0_i32 = arith.constant 0 : i32
    %6 = arith.cmpi eq, %c8_i32, %c0_i32 : i32
    %c1_i32 = arith.constant 1 : i32
    %7 = arith.select %6, %c1_i32, %c8_i32 : i32
    %8 = vector.broadcast %7 : i32 to vector<8x1xi32>
    %9 = arith.remsi %5, %8 : vector<8x1xi32>
    %c0_i32_6 = arith.constant 0 : i32
    %10 = vector.broadcast %c0_i32_6 : i32 to vector<8x1xi32>
    %11 = arith.cmpi ne, %9, %10 : vector<8x1xi32>
    %c0_i32_7 = arith.constant 0 : i32
    %12 = vector.broadcast %c0_i32_7 : i32 to vector<8x1xi32>
    %13 = arith.cmpi slt, %9, %12 : vector<8x1xi32>
    %c0_i32_8 = arith.constant 0 : i32
    %14 = arith.cmpi slt, %7, %c0_i32_8 : i32
    %15 = vector.broadcast %14 : i1 to vector<8x1xi1>
    %16 = vector.broadcast %15 : vector<8x1xi1> to vector<8x1xi1>
    %17 = arith.xori %13, %16 : vector<8x1xi1>
    %18 = arith.andi %17, %11 : vector<8x1xi1>
    %19 = vector.broadcast %7 : i32 to vector<8x1xi32>
    %20 = arith.addi %9, %19 : vector<8x1xi32>
    %21 = arith.select %18, %20, %9 : vector<8x1xi1>, vector<8x1xi32>
    %c0_9 = arith.constant 0 : index
    %c0_10 = arith.constant 0 : index
    %22 = vector.load %arg7[%c0_9, %c0_10] : memref<8x140xf32, #tpu.memory_space<vmem>>, vector<8x128xf32>
    %c0_11 = arith.constant 0 : index
    %c0_12 = arith.constant 0 : index
    %23 = vector.load %arg3[%c0_11, %c0_12] : memref<128x16xf32, #tpu.memory_space<vmem>>, vector<128x16xf32>
    %cst_13 = arith.constant dense<0.000000e+00> : vector<8x16xf32>
    %24 = tpu.matmul %22, %23, %cst_13 {dimension_numbers = #tpu.dot_dimension_numbers<[1], [0], [0], [1], [0, 0, 1, 1], [], []>} : vector<8x128xf32>, vector<128x16xf32>, vector<8x16xf32> -> vector<8x16xf32>
    %25 = vector.extract_strided_slice %24 {offsets = [0, 0], sizes = [8, 8], strides = [1, 1]} : vector<8x16xf32> to vector<8x8xf32>
    %26 = vector.extract_strided_slice %24 {offsets = [0, 8], sizes = [8, 8], strides = [1, 1]} : vector<8x16xf32> to vector<8x8xf32>
    %27 = vector.extract_strided_slice %26 {offsets = [6, 0], sizes = [2, 8], strides = [1, 1]} : vector<8x8xf32> to vector<2x8xf32>
    %28 = vector.extract_strided_slice %26 {offsets = [0, 0], sizes = [6, 8], strides = [1, 1]} : vector<8x8xf32> to vector<6x8xf32>
    %29 = tpu.concatenate %27, %28 in 0 : vector<2x8xf32>, vector<6x8xf32> -> vector<8x8xf32>
    %c2_i32 = arith.constant 2 : i32
    %30 = vector.broadcast %c2_i32 : i32 to vector<8x1xi32>
    %31 = arith.cmpi sge, %21, %30 : vector<8x1xi32>
    %cst_14 = arith.constant 0.000000e+00 : f32
    %32 = vector.shape_cast %31 : vector<8x1xi1> to vector<8x1xi1>
    %33 = vector.broadcast %32 : vector<8x1xi1> to vector<8x8xi1>
    %34 = vector.broadcast %cst_14 : f32 to vector<8x8xf32>
    %35 = arith.select %33, %29, %34 : vector<8x8xi1>, vector<8x8xf32>
    %36 = arith.addf %25, %35 : vector<8x8xf32>
    %c0_15 = arith.constant 0 : index
    %c0_16 = arith.constant 0 : index
    %37 = vector.load %arg2[%c0_15, %c0_16] : memref<3x8xf32, #tpu.memory_space<vmem>>, vector<1x8xf32>
    %38 = vector.broadcast %37 : vector<1x8xf32> to vector<8x8xf32>
    %39 = arith.addf %36, %38 : vector<8x8xf32>
    %40 = vector.extract_strided_slice %39 {offsets = [0, 0], sizes = [8, 4], strides = [1, 1]} : vector<8x8xf32> to vector<8x4xf32>
    %41 = math.tanh %40 : vector<8x4xf32>
    %42 = vector.extract_strided_slice %39 {offsets = [0, 4], sizes = [8, 4], strides = [1, 1]} : vector<8x8xf32> to vector<8x4xf32>
    %cst_17 = arith.constant 5.000000e-01 : f32
    %43 = vector.broadcast %cst_17 : f32 to vector<8x4xf32>
    %44 = arith.mulf %43, %42 : vector<8x4xf32>
    %45 = math.tanh %44 : vector<8x4xf32>
    %cst_18 = arith.constant 1.000000e+00 : f32
    %46 = vector.broadcast %cst_18 : f32 to vector<8x4xf32>
    %47 = arith.addf %45, %46 : vector<8x4xf32>
    %cst_19 = arith.constant 5.000000e-01 : f32
    %48 = vector.broadcast %cst_19 : f32 to vector<8x4xf32>
    %49 = arith.mulf %48, %47 : vector<8x4xf32>
    %50 = arith.mulf %41, %49 : vector<8x4xf32>
    %c0_20 = arith.constant 0 : index
    %c128 = arith.constant 128 : index
    %51 = vector.load %arg7[%c0_20, %c128] : memref<8x140xf32, #tpu.memory_space<vmem>>, vector<8x4xf32>
    tpu.vector_store %arg7[%c0_20, %c128], %50 {strides = array<i32>} : memref<8x140xf32, #tpu.memory_space<vmem>>, vector<8x4xf32>,
    %c0_21 = arith.constant 0 : index
    %c4_22 = arith.constant 4 : index
    %52 = vector.load %arg6[%c0_21, %c4_22] : memref<8x16xf32, #tpu.memory_space<vmem>>, vector<8x4xf32>
    tpu.vector_store %arg6[%c0_21, %c4_22], %50 {strides = array<i32>} : memref<8x16xf32, #tpu.memory_space<vmem>>, vector<8x4xf32>,
    %c0_23 = arith.constant 0 : index
    %c0_24 = arith.constant 0 : index
    %53 = vector.load %arg7[%c0_23, %c0_24] : memref<8x140xf32, #tpu.memory_space<vmem>>, vector<8x132xf32>
    %c0_25 = arith.constant 0 : index
    %c0_26 = arith.constant 0 : index
    %54 = vector.load %arg4[%c0_25, %c0_26] : memref<132x16xf32, #tpu.memory_space<vmem>>, vector<132x16xf32>
    %cst_27 = arith.constant dense<0.000000e+00> : vector<8x16xf32>
    %55 = tpu.matmul %53, %54, %cst_27 {dimension_numbers = #tpu.dot_dimension_numbers<[1], [0], [0], [1], [0, 0, 1, 1], [], []>} : vector<8x132xf32>, vector<132x16xf32>, vector<8x16xf32> -> vector<8x16xf32>
    %56 = vector.extract_strided_slice %55 {offsets = [0, 0], sizes = [8, 8], strides = [1, 1]} : vector<8x16xf32> to vector<8x8xf32>
    %57 = vector.extract_strided_slice %55 {offsets = [0, 8], sizes = [8, 8], strides = [1, 1]} : vector<8x16xf32> to vector<8x8xf32>
    %58 = vector.extract_strided_slice %57 {offsets = [4, 0], sizes = [4, 8], strides = [1, 1]} : vector<8x8xf32> to vector<4x8xf32>
    %59 = vector.extract_strided_slice %57 {offsets = [0, 0], sizes = [4, 8], strides = [1, 1]} : vector<8x8xf32> to vector<4x8xf32>
    %60 = tpu.concatenate %58, %59 in 0 : vector<4x8xf32>, vector<4x8xf32> -> vector<8x8xf32>
    %c4_i32 = arith.constant 4 : i32
    %61 = vector.broadcast %c4_i32 : i32 to vector<8x1xi32>
    %62 = arith.cmpi sge, %21, %61 : vector<8x1xi32>
    %cst_28 = arith.constant 0.000000e+00 : f32
    %63 = vector.shape_cast %62 : vector<8x1xi1> to vector<8x1xi1>
    %64 = vector.broadcast %63 : vector<8x1xi1> to vector<8x8xi1>
    %65 = vector.broadcast %cst_28 : f32 to vector<8x8xf32>
    %66 = arith.select %64, %60, %65 : vector<8x8xi1>, vector<8x8xf32>
    %67 = arith.addf %56, %66 : vector<8x8xf32>
    %c1 = arith.constant 1 : index
    %c0_29 = arith.constant 0 : index
    %68 = vector.load %arg2[%c1, %c0_29] : memref<3x8xf32, #tpu.memory_space<vmem>>, vector<1x8xf32>
    %69 = vector.broadcast %68 : vector<1x8xf32> to vector<8x8xf32>
    %70 = arith.addf %67, %69 : vector<8x8xf32>
    %71 = vector.extract_strided_slice %70 {offsets = [0, 0], sizes = [8, 4], strides = [1, 1]} : vector<8x8xf32> to vector<8x4xf32>
    %72 = math.tanh %71 : vector<8x4xf32>
    %73 = vector.extract_strided_slice %70 {offsets = [0, 4], sizes = [8, 4], strides = [1, 1]} : vector<8x8xf32> to vector<8x4xf32>
    %cst_30 = arith.constant 5.000000e-01 : f32
    %74 = vector.broadcast %cst_30 : f32 to vector<8x4xf32>
    %75 = arith.mulf %74, %73 : vector<8x4xf32>
    %76 = math.tanh %75 : vector<8x4xf32>
    %cst_31 = arith.constant 1.000000e+00 : f32
    %77 = vector.broadcast %cst_31 : f32 to vector<8x4xf32>
    %78 = arith.addf %76, %77 : vector<8x4xf32>
    %cst_32 = arith.constant 5.000000e-01 : f32
    %79 = vector.broadcast %cst_32 : f32 to vector<8x4xf32>
    %80 = arith.mulf %79, %78 : vector<8x4xf32>
    %81 = arith.mulf %72, %80 : vector<8x4xf32>
    %c0_33 = arith.constant 0 : index
    %c132 = arith.constant 132 : index
    %82 = vector.load %arg7[%c0_33, %c132] : memref<8x140xf32, #tpu.memory_space<vmem>>, vector<8x4xf32>
    tpu.vector_store %arg7[%c0_33, %c132], %81 {strides = array<i32>} : memref<8x140xf32, #tpu.memory_space<vmem>>, vector<8x4xf32>,
    %c0_34 = arith.constant 0 : index
    %c8 = arith.constant 8 : index
    %83 = vector.load %arg6[%c0_34, %c8] : memref<8x16xf32, #tpu.memory_space<vmem>>, vector<8x4xf32>
    tpu.vector_store %arg6[%c0_34, %c8], %81 {strides = array<i32>} : memref<8x16xf32, #tpu.memory_space<vmem>>, vector<8x4xf32>,
    %c0_35 = arith.constant 0 : index
    %c0_36 = arith.constant 0 : index
    %84 = vector.load %arg7[%c0_35, %c0_36] : memref<8x140xf32, #tpu.memory_space<vmem>>, vector<8x136xf32>
    %c0_37 = arith.constant 0 : index
    %c0_38 = arith.constant 0 : index
    %85 = vector.load %arg5[%c0_37, %c0_38] : memref<136x8xf32, #tpu.memory_space<vmem>>, vector<136x8xf32>
    %cst_39 = arith.constant dense<0.000000e+00> : vector<8x8xf32>
    %86 = tpu.matmul %84, %85, %cst_39 {dimension_numbers = #tpu.dot_dimension_numbers<[1], [0], [0], [1], [0, 0, 1, 1], [], []>} : vector<8x136xf32>, vector<136x8xf32>, vector<8x8xf32> -> vector<8x8xf32>
    %c2 = arith.constant 2 : index
    %c0_40 = arith.constant 0 : index
    %87 = vector.load %arg2[%c2, %c0_40] : memref<3x8xf32, #tpu.memory_space<vmem>>, vector<1x8xf32>
    %88 = vector.broadcast %87 : vector<1x8xf32> to vector<8x8xf32>
    %89 = arith.addf %86, %88 : vector<8x8xf32>
    %90 = vector.extract_strided_slice %89 {offsets = [0, 0], sizes = [8, 4], strides = [1, 1]} : vector<8x8xf32> to vector<8x4xf32>
    %91 = math.tanh %90 : vector<8x4xf32>
    %92 = vector.extract_strided_slice %89 {offsets = [0, 4], sizes = [8, 4], strides = [1, 1]} : vector<8x8xf32> to vector<8x4xf32>
    %cst_41 = arith.constant 5.000000e-01 : f32
    %93 = vector.broadcast %cst_41 : f32 to vector<8x4xf32>
    %94 = arith.mulf %93, %92 : vector<8x4xf32>
    %95 = math.tanh %94 : vector<8x4xf32>
    %cst_42 = arith.constant 1.000000e+00 : f32
    %96 = vector.broadcast %cst_42 : f32 to vector<8x4xf32>
    %97 = arith.addf %95, %96 : vector<8x4xf32>
    %cst_43 = arith.constant 5.000000e-01 : f32
    %98 = vector.broadcast %cst_43 : f32 to vector<8x4xf32>
    %99 = arith.mulf %98, %97 : vector<8x4xf32>
    %100 = arith.mulf %91, %99 : vector<8x4xf32>
    %c0_44 = arith.constant 0 : index
    %c136 = arith.constant 136 : index
    %101 = vector.load %arg7[%c0_44, %c136] : memref<8x140xf32, #tpu.memory_space<vmem>>, vector<8x4xf32>
    tpu.vector_store %arg7[%c0_44, %c136], %100 {strides = array<i32>} : memref<8x140xf32, #tpu.memory_space<vmem>>, vector<8x4xf32>,
    %c0_45 = arith.constant 0 : index
    %c12 = arith.constant 12 : index
    %102 = vector.load %arg6[%c0_45, %c12] : memref<8x16xf32, #tpu.memory_space<vmem>>, vector<8x4xf32>
    tpu.vector_store %arg6[%c0_45, %c12], %100 {strides = array<i32>} : memref<8x16xf32, #tpu.memory_space<vmem>>, vector<8x4xf32>,
    return
  }
  func.func @transform_0(%arg0: i32) -> (i32, i32) {
    %c0_i32 = arith.constant 0 : i32
    %c0_i32_0 = arith.constant 0 : i32
    return %arg0, %c0_i32 : i32, i32
  }
  func.func @transform_1(%arg0: i32) -> (i32, i32) {
    %c0_i32 = arith.constant 0 : i32
    %c0_i32_0 = arith.constant 0 : i32
    %c0_i32_1 = arith.constant 0 : i32
    return %c0_i32, %c0_i32_0 : i32, i32
  }
  func.func @transform_2(%arg0: i32) -> (i32, i32) {
    %c0_i32 = arith.constant 0 : i32
    %c0_i32_0 = arith.constant 0 : i32
    %c0_i32_1 = arith.constant 0 : i32
    return %c0_i32, %c0_i32_0 : i32, i32
  }
  func.func @transform_3(%arg0: i32) -> (i32, i32) {
    %c0_i32 = arith.constant 0 : i32
    %c0_i32_0 = arith.constant 0 : i32
    %c0_i32_1 = arith.constant 0 : i32
    return %c0_i32, %c0_i32_0 : i32, i32
  }
  func.func @transform_4(%arg0: i32) -> (i32, i32) {
    %c0_i32 = arith.constant 0 : i32
    %c0_i32_0 = arith.constant 0 : i32
    %c0_i32_1 = arith.constant 0 : i32
    return %c0_i32, %c0_i32_0 : i32, i32
  }
  func.func @transform_5(%arg0: i32) -> (i32, i32) {
    %c0_i32 = arith.constant 0 : i32
    %c0_i32_0 = arith.constant 0 : i32
    return %arg0, %c0_i32 : i32, i32
  }
}

</mosaic_0001>

<llo_original>
// kernel: tpu_custom_call.1
$region0: #{tpu_custom_call.1}
  #allocation0 [shape = 'u32[]', space=smem, size = 0x4, offset = 0x4, fixed_abs, tag = 'smem constant byte address 0x4 - core index']
  #allocation1 [shape = 'u32[144,128]{1,0:T(1,128)}', space=vmem, size = 0x12000, scoped, tag = 'internal scratch']
  #allocation2 [shape = 'f32[8,140]{1,0:T(8,128)}', space=vmem, size = 0x2000, scoped, tag = 'scratch operand']
  %s0 = inlined_call_operand.vmem [shape: f32[16,4], index: 0, kind: input, shape index: {}]
  %s1 = inlined_call_operand.vmem [shape: f32[3,8], index: 1, kind: input, shape index: {}]
  %s2 = inlined_call_operand.vmem [shape: f32[128,16], index: 2, kind: input, shape index: {}]
  %s3 = inlined_call_operand.vmem [shape: f32[132,16], index: 3, kind: input, shape index: {}]
  %s4 = inlined_call_operand.vmem [shape: f32[136,8], index: 4, kind: input, shape index: {}]
  %s5 = inlined_call_operand.hbm [shape: f32[16,16], index: 5, kind: output, shape index: {}]
  %s6 = sld [smem:[#allocation0]]
  $region53: #{tpu_custom_call.1} parent=0
    _
  %s8 = ssub.s32 1, %s6
  %s9 = scalar_select 0, %s8, %s6
  $region1: #{tpu_custom_call.1} parent=0
    #allocation3 [shape = 'u8[8192]{0}', space=vmem, size = 0x2000, scoped, tag = 'output window, operand 0']
    #allocation4 [shape = 's32[2]{0}', space=sflag, size = 0x8, scoped, tag = 'scoped memory for tpu_custom_call.1']
    %10 = vsyncpa [#allocation4], 0
    %s11 = scalar_lea.sflag [#allocation4], 1
    %12 = vsyncpa %s11, 0
    loop: start=0, step=1, limit=4
    $region2: #{tpu_custom_call.1} parent=1 // loop_pre_header
      _
    $region3: #{tpu_custom_call.1} parent=1 // loop_header
      %s14 = sphi 0, %s18
      %p15 = scmp.ge.s32.totalorder %s14, 4
      %s24 = sphi 0, %s26
      %s27 = sphi 0, %s24
      %s28 = sphi 0, %s27
      %s44 = sphi 0, %s28
      %s48 = sphi 0, %s48
      %s50 = sphi 0, %s48
      %s51 = sphi 0, %s50
      %s65 = sphi 0, %s51
      %s69 = sphi 0, %s69
      %s71 = sphi 0, %s69
      %s72 = sphi 0, %s71
      %s86 = sphi 0, %s72
      %s90 = sphi 0, %s90
      %s92 = sphi 0, %s90
      %s93 = sphi 0, %s92
      %s107 = sphi 0, %s93
      %s111 = sphi 0, %s111
      %s113 = sphi 0, %s111
      %s114 = sphi 0, %s113
      %s128 = sphi 0, %s114
      %s134 = sphi 0, %s136
      %s137 = sphi 0, %s134
      %s138 = sphi 0, %s137
      %s154 = sphi 0, %s138
    $region4: #{tpu_custom_call.1} parent=1 // loop_header_branch
      %17 = sbr.rel (%p15) target = $region8
    $region5: #{tpu_custom_call.1} parent=1 // loop_body
      %s19 = ssub.s32 %s14, 1
      %s20 = ssub.s32 %s14, 2
      %s21 = sadd.s32 %s14, 1
      %s22 = ssub.s32 %s14, %s21
      %p23 = scmp.eq.s32.totalorder %s22, 0
      %s25 = sadd.s32 %s24, 1
      %s26 = scalar_select %p23, %s24, %s25
      %p29 = pneg %p23
      %p30 = scmp.eq.s32.totalorder %s14, 1
      %p31 = por %p29, %p30
      %p32 = scmp.ne.s32.totalorder %s24, %s27
      %p33 = scmp.eq.s32.totalorder %s14, 0
      %p34 = por %p32, %p33
      %p35 = scmp.ne.s32.totalorder %s24, %s27
      %p36 = scmp.eq.s32.totalorder %s19, 1
      %p37 = por %p35, %p36
      %p38 = scmp.ne.s32.totalorder %s27, %s28
      %p39 = scmp.eq.s32.totalorder %s19, 0
      %p40 = por %p38, %p39
      %p41 = scmp.ne.s32.totalorder %s27, %s28
      %p42 = scmp.eq.s32.totalorder %s20, 1
      %p43 = por %p41, %p42
      %p45 = scmp.ne.s32.totalorder %s28, %s44
      %p46 = scmp.eq.s32.totalorder %s20, 0
      %p47 = por %p45, %p46
      %s49 = sadd.s32 %s48, 1
      %p52 = scmp.eq.s32.totalorder %s14, 1
      %p53 = scmp.ne.s32.totalorder %s48, %s50
      %p54 = scmp.eq.s32.totalorder %s14, 0
      %p55 = por %p53, %p54
      %p56 = scmp.ne.s32.totalorder %s48, %s50
      %p57 = scmp.eq.s32.totalorder %s19, 1
      %p58 = por %p56, %p57
      %p59 = scmp.ne.s32.totalorder %s50, %s51
      %p60 = scmp.eq.s32.totalorder %s19, 0
      %p61 = por %p59, %p60
      %p62 = scmp.ne.s32.totalorder %s50, %s51
      %p63 = scmp.eq.s32.totalorder %s20, 1
      %p64 = por %p62, %p63
      %p66 = scmp.ne.s32.totalorder %s51, %s65
      %p67 = scmp.eq.s32.totalorder %s20, 0
      %p68 = por %p66, %p67
      %s70 = sadd.s32 %s69, 1
      %p73 = scmp.eq.s32.totalorder %s14, 1
      %p74 = scmp.ne.s32.totalorder %s69, %s71
      %p75 = scmp.eq.s32.totalorder %s14, 0
      %p76 = por %p74, %p75
      %p77 = scmp.ne.s32.totalorder %s69, %s71
      %p78 = scmp.eq.s32.totalorder %s19, 1
      %p79 = por %p77, %p78
      %p80 = scmp.ne.s32.totalorder %s71, %s72
      %p81 = scmp.eq.s32.totalorder %s19, 0
      %p82 = por %p80, %p81
      %p83 = scmp.ne.s32.totalorder %s71, %s72
      %p84 = scmp.eq.s32.totalorder %s20, 1
      %p85 = por %p83, %p84
      %p87 = scmp.ne.s32.totalorder %s72, %s86
      %p88 = scmp.eq.s32.totalorder %s20, 0
      %p89 = por %p87, %p88
      %s91 = sadd.s32 %s90, 1
      %p94 = scmp.eq.s32.totalorder %s14, 1
      %p95 = scmp.ne.s32.totalorder %s90, %s92
      %p96 = scmp.eq.s32.totalorder %s14, 0
      %p97 = por %p95, %p96
      %p98 = scmp.ne.s32.totalorder %s90, %s92
      %p99 = scmp.eq.s32.totalorder %s19, 1
      %p100 = por %p98, %p99
      %p101 = scmp.ne.s32.totalorder %s92, %s93
      %p102 = scmp.eq.s32.totalorder %s19, 0
      %p103 = por %p101, %p102
      %p104 = scmp.ne.s32.totalorder %s92, %s93
      %p105 = scmp.eq.s32.totalorder %s20, 1
      %p106 = por %p104, %p105
      %p108 = scmp.ne.s32.totalorder %s93, %s107
      %p109 = scmp.eq.s32.totalorder %s20, 0
      %p110 = por %p108, %p109
      %s112 = sadd.s32 %s111, 1
      %p115 = scmp.eq.s32.totalorder %s14, 1
      %p116 = scmp.ne.s32.totalorder %s111, %s113
      %p117 = scmp.eq.s32.totalorder %s14, 0
      %p118 = por %p116, %p117
      %p119 = scmp.ne.s32.totalorder %s111, %s113
      %p120 = scmp.eq.s32.totalorder %s19, 1
      %p121 = por %p119, %p120
      %p122 = scmp.ne.s32.totalorder %s113, %s114
      %p123 = scmp.eq.s32.totalorder %s19, 0
      %p124 = por %p122, %p123
      %p125 = scmp.ne.s32.totalorder %s113, %s114
      %p126 = scmp.eq.s32.totalorder %s20, 1
      %p127 = por %p125, %p126
      %p129 = scmp.ne.s32.totalorder %s114, %s128
      %p130 = scmp.eq.s32.totalorder %s20, 0
      %p131 = por %p129, %p130
      %s132 = ssub.s32 %s14, %s21
      %p133 = scmp.eq.s32.totalorder %s132, 0
      %s135 = sadd.s32 %s134, 1
      %s136 = scalar_select %p133, %s134, %s135
      %p139 = pneg %p133
      %p140 = scmp.eq.s32.totalorder %s14, 1
      %p141 = por %p139, %p140
      %p142 = scmp.ne.s32.totalorder %s134, %s137
      %p143 = scmp.eq.s32.totalorder %s14, 0
      %p144 = por %p142, %p143
      %p145 = scmp.ne.s32.totalorder %s134, %s137
      %p146 = scmp.eq.s32.totalorder %s19, 1
      %p147 = por %p145, %p146
      %p148 = scmp.ne.s32.totalorder %s137, %s138
      %p149 = scmp.eq.s32.totalorder %s19, 0
      %p150 = por %p148, %p149
      %p151 = scmp.ne.s32.totalorder %s137, %s138
      %p152 = scmp.eq.s32.totalorder %s20, 1
      %p153 = por %p151, %p152
      %p155 = scmp.ne.s32.totalorder %s138, %s154
      %p156 = scmp.eq.s32.totalorder %s20, 0
      %p157 = por %p155, %p156
      %p158 = scmp.le.s32.totalorder 1, %s14
      %p159 = scmp.lt.s32.totalorder %s14, 3
      %p160 = pnand %p158, %p159
      %p161 = pneg %p160
      // Predicated region
      $region9: #{tpu_custom_call.1} parent=5 // pred_check
        _
      $region10: #{tpu_custom_call.1} parent=5 // pred_check_branch
        %163 = sbr.rel (%p160) target = $region12
      $region11: #{tpu_custom_call.1} parent=5 // pred_region
        %s164 = ssub.s32 %s14, 1
        // Predicated region
        $region13: #{tpu_custom_call.1} parent=11 // pred_check
          %p165 = pneg %p61
        $region14: #{tpu_custom_call.1} parent=11 // pred_check_branch
          %167 = sbr.rel (%p165) target = $region16
        $region15: #{tpu_custom_call.1} parent=11 // pred_region
          _
        $region16: #{tpu_custom_call.1} parent=11 // pred_fallthru
          _
        // Predicated region
        $region17: #{tpu_custom_call.1} parent=11 // pred_check
          %p168 = pneg %p82
        $region18: #{tpu_custom_call.1} parent=11 // pred_check_branch
          %170 = sbr.rel (%p168) target = $region20
        $region19: #{tpu_custom_call.1} parent=11 // pred_region
          _
        $region20: #{tpu_custom_call.1} parent=11 // pred_fallthru
          _
        // Predicated region
        $region21: #{tpu_custom_call.1} parent=11 // pred_check
          %p171 = pneg %p103
        $region22: #{tpu_custom_call.1} parent=11 // pred_check_branch
          %173 = sbr.rel (%p171) target = $region24
        $region23: #{tpu_custom_call.1} parent=11 // pred_region
          _
        $region24: #{tpu_custom_call.1} parent=11 // pred_fallthru
          _
        // Predicated region
        $region25: #{tpu_custom_call.1} parent=11 // pred_check
          %p174 = pneg %p124
        $region26: #{tpu_custom_call.1} parent=11 // pred_check_branch
          %176 = sbr.rel (%p174) target = $region28
        $region27: #{tpu_custom_call.1} parent=11 // pred_region
          _
        $region28: #{tpu_custom_call.1} parent=11 // pred_fallthru
          _
      $region12: #{tpu_custom_call.1} parent=5 // pred_fallthru
        _
      %p177 = scmp.lt.s32.totalorder %s14, 2
      // Predicated region
      $region29: #{tpu_custom_call.1} parent=5 // pred_check
        %p178 = pneg %p177
      $region30: #{tpu_custom_call.1} parent=5 // pred_check_branch
        %180 = sbr.rel (%p178) target = $region32
      $region31: #{tpu_custom_call.1} parent=5 // pred_region
        // Predicated region
        $region33: #{tpu_custom_call.1} parent=31 // pred_check
          %p181 = pneg %p34
        $region34: #{tpu_custom_call.1} parent=31 // pred_check_branch
          %183 = sbr.rel (%p181) target = $region36
        $region35: #{tpu_custom_call.1} parent=31 // pred_region
          %p184 = scmp.lt.s32.totalorder %s14, 1
          %s185 = scalar_select %p184, %s14, 1
          %s186 = smul.addr %s185, 8
          %s187 = scalar_lea.vmem %s0, %s186
        $region36: #{tpu_custom_call.1} parent=31 // pred_fallthru
          _
      $region32: #{tpu_custom_call.1} parent=5 // pred_fallthru
        _
      %p188 = scmp.le.s32.totalorder 1, %s14
      %p189 = scmp.lt.s32.totalorder %s14, 3
      %p190 = pnand %p188, %p189
      %p191 = pneg %p190
      // Predicated region
      $region37: #{tpu_custom_call.1} parent=5 // pred_check
        _
      $region38: #{tpu_custom_call.1} parent=5 // pred_check_branch
        %193 = sbr.rel (%p190) target = $region40
      $region39: #{tpu_custom_call.1} parent=5 // pred_region
        %s194 = ssub.s32 %s14, 1
        %p195 = scmp.lt.s32.totalorder %s19, 1
        %s196 = scalar_select %p195, %s19, 1
        %s197 = smul.addr %s196, 8
        %s198 = scalar_lea.vmem %s0, %s197
        %p199 = pneg %p40
        %p200 = pneg %p37
        %p201 = pneg %p61
        %p202 = pneg %p58
        %p203 = pneg %p82
        %p204 = pneg %p79
        %p205 = pneg %p103
        %p206 = pneg %p100
        %p207 = pneg %p124
        %p208 = pneg %p121
        %p209 = pneg %p150
        %p210 = pneg %p147
        %s211 = sand.u32 %s137, 1
        %s212 = scalar_lea.sflag [#allocation4], %s211
        %s213 = sand.u32 %s137, 1
        %s214 = smul.addr %s213, 8
        %s215 = scalar_lea.vmem [#allocation3], %s214
        %p216 = scmp.lt.s32.totalorder %s19, 1
        %s217 = scalar_select %p216, %s19, 1
        %s218 = smul.addr %s217, 8
        %s219 = scalar_lea.vmem %s0, %s218
        %v220 = vld [vmem:[%s219] sm:$0xff]
        %vm221 = vcmask 31744
        %222 = vst.msk [vmem:[%s215] sm:$0xff] %vm221, %v220
        %223 = vst.msk [vmem:[#allocation2] sm:$0xff] %vm221, %v220
        %vm224 = vcmask 1047584
        %225 = vst.msk [vmem:[#allocation2] sm:$0xff] %vm224, 0.0
        %v226 = vlaneseq
        %v227 = vshrl.u32 %v226, 7
        %vm228 = vcmp.lt.s32.totalorder %v227, 0
        %v229 = vsub.s32 0, %v227
        %v230 = vsel %vm228, %v229, %v227
        %v231 = vshrl.u32 %v230, 3
        %v232 = vand.u32 %v230, 7
        %v233 = vsub.s32 0, %v232
        %v234 = vsel %vm228, %v233, %v232
        %vm235 = vcmp.ne.s32.totalorder %v234, 0
        %vm236 = vcmp.lt.s32.totalorder %v234, 0
        %vm237 = vmand %vm236, %vm235
        %v238 = vadd.s32 %v234, 8
        %v239 = vsel %vm237, %v238, %v234
        %v240 = vld [vmem:[#allocation2] sm:$0xff]
        %v241 = vld [vmem:[%s2] sm:$0xff]
        %v242 = vld [vmem:[%s2 + $0x8] sm:$0xff]
        %v243 = vld [vmem:[%s2 + $0x10] sm:$0xff]
        %v244 = vld [vmem:[%s2 + $0x18] sm:$0xff]
        %v245 = vld [vmem:[%s2 + $0x20] sm:$0xff]
        %v246 = vld [vmem:[%s2 + $0x28] sm:$0xff]
        %v247 = vld [vmem:[%s2 + $0x30] sm:$0xff]
        %v248 = vld [vmem:[%s2 + $0x38] sm:$0xff]
        %v249 = vld [vmem:[%s2 + $0x40] sm:$0xff]
        %v250 = vld [vmem:[%s2 + $0x48] sm:$0xff]
        %v251 = vld [vmem:[%s2 + $0x50] sm:$0xff]
        %v252 = vld [vmem:[%s2 + $0x58] sm:$0xff]
        %v253 = vld [vmem:[%s2 + $0x60] sm:$0xff]
        %v254 = vld [vmem:[%s2 + $0x68] sm:$0xff]
        %v255 = vld [vmem:[%s2 + $0x70] sm:$0xff]
        %v256 = vld [vmem:[%s2 + $0x78] sm:$0xff]
        %257 = vmatprep.subr.mxu0 0.0
        %258 = vmatpush1.msra.mxu0 %v241
        %259 = vmatprep.subr.mxu0 0.0
        %260 = vmatpush1.msra.mxu0 %v242
        %261 = vmatprep.subr.mxu0 0.0
        %262 = vmatpush1.msra.mxu0 %v243
        %263 = vmatprep.subr.mxu0 0.0
        %264 = vmatpush1.msra.mxu0 %v244
        %265 = vmatprep.subr.mxu0 0.0
        %266 = vmatpush1.msra.mxu0 %v245
        %267 = vmatprep.subr.mxu0 0.0
        %268 = vmatpush1.msra.mxu0 %v246
        %269 = vmatprep.subr.mxu0 0.0
        %270 = vmatpush1.msra.mxu0 %v247
        %271 = vmatprep.subr.mxu0 0.0
        %272 = vmatpush1.msra.mxu0 %v248
        %273 = vmatprep.subr.mxu0 0.0
        %274 = vmatpush1.msra.mxu0 %v249
        %275 = vmatprep.subr.mxu0 0.0
        %276 = vmatpush1.msra.mxu0 %v250
        %277 = vmatprep.subr.mxu0 0.0
        %278 = vmatpush1.msra.mxu0 %v251
        %279 = vmatprep.subr.mxu0 0.0
        %280 = vmatpush1.msra.mxu0 %v252
        %281 = vmatprep.subr.mxu0 0.0
        %282 = vmatpush1.msra.mxu0 %v253
        %283 = vmatprep.subr.mxu0 0.0
        %284 = vmatpush1.msra.mxu0 %v254
        %285 = vmatprep.subr.mxu0 0.0
        %286 = vmatpush1.msra.mxu0 %v255
        %287 = vmatprep.subr.mxu0 0.0
        %288 = vmatpush1.msra.mxu0 %v256
        %289 = vmatprep.subr.mxu0 0.0
        %290 = vmatpush1.msra.mxu0 0.0
        %291 = vmatprep.subr.mxu0 0.0
        %292 = vmatpush1.msra.mxu0 0.0
        %293 = vmatprep.subr.mxu0 0.0
        %294 = vmatpush1.msra.mxu0 0.0
        %295 = vmatprep.subr.mxu0 0.0
        %296 = vmatpush1.msra.mxu0 0.0
        %297 = vmatprep.subr.mxu0 0.0
        %298 = vmatpush1.msra.mxu0 0.0
        %299 = vmatprep.subr.mxu0 0.0
        %300 = vmatpush1.msra.mxu0 0.0
        %301 = vmatprep.subr.mxu0 0.0
        %302 = vmatpush1.msra.mxu0 0.0
        %303 = vmatprep.subr.mxu0 0.0
        %304 = vmatpush1.msra.mxu0 0.0
        %305 = vmatprep.subr.mxu0 0.0
        %306 = vmatpush1.msra.mxu0 0.0
        %307 = vmatprep.subr.mxu0 0.0
        %308 = vmatpush1.msra.mxu0 0.0
        %309 = vmatprep.subr.mxu0 0.0
        %310 = vmatpush1.msra.mxu0 0.0
        %311 = vmatprep.subr.mxu0 0.0
        %312 = vmatpush1.msra.mxu0 0.0
        %313 = vmatprep.subr.mxu0 0.0
        %314 = vmatpush1.msra.mxu0 0.0
        %315 = vmatprep.subr.mxu0 0.0
        %316 = vmatpush1.msra.mxu0 0.0
        %317 = vmatprep.subr.mxu0 0.0
        %318 = vmatpush1.msra.mxu0 0.0
        %319 = vmatprep.subr.mxu0 0.0
        %320 = vmatpush1.msra.mxu0 0.0
        %321 = vmatprep.mubr.f32.mxu0 0.0
        %322 = vmatmul.mubr.f32.gmra.mrb[0].mxu0 %v240
        %v323 = vpop.f32.mrb[0].mxu0
        %v324 = vadd.f32 0.0, %v323
        %v325 = vpop.f32.mrb[0].mxu0
        %326 = vdwg.mxu0
        %v328 = vrot.slane %v324, 6
        %vm330 = vcmask 1041408
        %v331 = vsel %vm330, %v328, %v328
        %vm332 = vcmp.ge.s32.totalorder %v239, 2
        %v333 = vsel %vm332, 1, 0
        %vm334 = vcmp.eq.s32.totalorder %v333, 1
        %v335 = vsel %vm334, %v331, 0.0
        %337 = vrot.lane.b32.xlu0 %v335, 120
        %v338 = vpop.permute.xlu0 %337
        %v340 = vadd.f32 %v324, %v338
        %v341 = vld [vmem:[%s1] sm:$0x1]
        %v342 = vlaneseq
        %v343 = vshrl.u32 %v342, 7
        %v344 = vsub.s32 0, %v343
        %v345 = vrot.slane %v341, %v344
        %v346 = vadd.f32 %v340, %v345
        %v347 = vtanh.pop %v346
        %v348 = vmul.f32 %v346, 0.5
        %v349 = vtanh.pop %v348
        %v350 = vadd.f32 %v349, 1.0
        %v351 = vmul.f32 %v350, 0.5
        %353 = vrot.lane.b32.xlu0 %v351, 124
        %v354 = vpop.permute.xlu0 %353
        %v356 = vmul.f32 %v347, %v354
        %357 = vst.msk [vmem:[#allocation2 + $0x8] sm:$0xff] %vm221, %v356
        %359 = vrot.lane.b32.xlu0 %v356, 4
        %v360 = vpop.permute.xlu0 %359
        %vm362 = vcmask 64544
        %363 = vst.msk [vmem:[%s215] sm:$0xff] %vm362, %v360
        %v364 = vld [vmem:[#allocation2] sm:$0xff]
        %v365 = vld [vmem:[#allocation2 + $0x8] sm:$0xff]
        %v366 = vld [vmem:[%s3] sm:$0xff]
        %v367 = vld [vmem:[%s3 + $0x8] sm:$0xff]
        %v368 = vld [vmem:[%s3 + $0x10] sm:$0xff]
        %v369 = vld [vmem:[%s3 + $0x18] sm:$0xff]
        %v370 = vld [vmem:[%s3 + $0x20] sm:$0xff]
        %v371 = vld [vmem:[%s3 + $0x28] sm:$0xff]
        %v372 = vld [vmem:[%s3 + $0x30] sm:$0xff]
        %v373 = vld [vmem:[%s3 + $0x38] sm:$0xff]
        %v374 = vld [vmem:[%s3 + $0x40] sm:$0xff]
        %v375 = vld [vmem:[%s3 + $0x48] sm:$0xff]
        %v376 = vld [vmem:[%s3 + $0x50] sm:$0xff]
        %v377 = vld [vmem:[%s3 + $0x58] sm:$0xff]
        %v378 = vld [vmem:[%s3 + $0x60] sm:$0xff]
        %v379 = vld [vmem:[%s3 + $0x68] sm:$0xff]
        %v380 = vld [vmem:[%s3 + $0x70] sm:$0xff]
        %v381 = vld [vmem:[%s3 + $0x78] sm:$0xff]
        %v382 = vld [vmem:[%s3 + $0x80] sm:$0xf]
        %v384 = vsel %vm221, %v365, 0
        %vm386 = vcmask 1043456
        %v388 = vsel %vm386, %v382, 0
        %390 = vmatprep.subr.mxu0 0.0
        %391 = vmatpush1.msra.mxu0 %v366
        %392 = vmatprep.subr.mxu0 0.0
        %393 = vmatpush1.msra.mxu0 %v367
        %394 = vmatprep.subr.mxu0 0.0
        %395 = vmatpush1.msra.mxu0 %v368
        %396 = vmatprep.subr.mxu0 0.0
        %397 = vmatpush1.msra.mxu0 %v369
        %398 = vmatprep.subr.mxu0 0.0
        %399 = vmatpush1.msra.mxu0 %v370
        %400 = vmatprep.subr.mxu0 0.0
        %401 = vmatpush1.msra.mxu0 %v371
        %402 = vmatprep.subr.mxu0 0.0
        %403 = vmatpush1.msra.mxu0 %v372
        %404 = vmatprep.subr.mxu0 0.0
        %405 = vmatpush1.msra.mxu0 %v373
        %406 = vmatprep.subr.mxu0 0.0
        %407 = vmatpush1.msra.mxu0 %v374
        %408 = vmatprep.subr.mxu0 0.0
        %409 = vmatpush1.msra.mxu0 %v375
        %410 = vmatprep.subr.mxu0 0.0
        %411 = vmatpush1.msra.mxu0 %v376
        %412 = vmatprep.subr.mxu0 0.0
        %413 = vmatpush1.msra.mxu0 %v377
        %414 = vmatprep.subr.mxu0 0.0
        %415 = vmatpush1.msra.mxu0 %v378
        %416 = vmatprep.subr.mxu0 0.0
        %417 = vmatpush1.msra.mxu0 %v379
        %418 = vmatprep.subr.mxu0 0.0
        %419 = vmatpush1.msra.mxu0 %v380
        %420 = vmatprep.subr.mxu0 0.0
        %421 = vmatpush1.msra.mxu0 %v381
        %422 = vmatprep.subr.mxu0 0.0
        %423 = vmatpush1.msra.mxu0 %v388
        %424 = vmatprep.subr.mxu0 0.0
        %425 = vmatpush1.msra.mxu0 0.0
        %426 = vmatprep.subr.mxu0 0.0
        %427 = vmatpush1.msra.mxu0 0.0
        %428 = vmatprep.subr.mxu0 0.0
        %429 = vmatpush1.msra.mxu0 0.0
        %430 = vmatprep.subr.mxu0 0.0
        %431 = vmatpush1.msra.mxu0 0.0
        %432 = vmatprep.subr.mxu0 0.0
        %433 = vmatpush1.msra.mxu0 0.0
        %434 = vmatprep.subr.mxu0 0.0
        %435 = vmatpush1.msra.mxu0 0.0
        %436 = vmatprep.subr.mxu0 0.0
        %437 = vmatpush1.msra.mxu0 0.0
        %438 = vmatprep.subr.mxu0 0.0
        %439 = vmatpush1.msra.mxu0 0.0
        %440 = vmatprep.subr.mxu0 0.0
        %441 = vmatpush1.msra.mxu0 0.0
        %442 = vmatprep.subr.mxu0 0.0
        %443 = vmatpush1.msra.mxu0 0.0
        %444 = vmatprep.subr.mxu0 0.0
        %445 = vmatpush1.msra.mxu0 0.0
        %446 = vmatprep.subr.mxu0 0.0
        %447 = vmatpush1.msra.mxu0 0.0
        %448 = vmatprep.subr.mxu0 0.0
        %449 = vmatpush1.msra.mxu0 0.0
        %450 = vmatprep.subr.mxu0 0.0
        %451 = vmatpush1.msra.mxu0 0.0
        %452 = vmatprep.subr.mxu0 0.0
        %453 = vmatpush1.msra.mxu0 0.0
        %454 = vmatprep.mubr.f32.mxu0 %v384
        %455 = vmatmul.mubr.f32.gmra.mrb[0].mxu0 %v364
        %v456 = vpop.f32.mrb[0].mxu0
        %v457 = vadd.f32 0.0, %v456
        %v458 = vpop.f32.mrb[0].mxu0
        %459 = vdwg.mxu0
        %v461 = vrot.slane %v457, 4
        %v463 = vsel %vm386, %v461, %v461
        %vm464 = vcmp.ge.s32.totalorder %v239, 4
        %v465 = vsel %vm464, 1, 0
        %vm466 = vcmp.eq.s32.totalorder %v465, 1
        %v467 = vsel %vm466, %v463, 0.0
        %469 = vrot.lane.b32.xlu0 %v467, 120
        %v470 = vpop.permute.xlu0 %469
        %v472 = vadd.f32 %v457, %v470
        %v473 = vld [vmem:[%s1 + $0x1] sm:$0x1]
        %v474 = vlaneseq
        %v475 = vshrl.u32 %v474, 7
        %v476 = vsub.s32 0, %v475
        %v477 = vrot.slane %v473, %v476
        %v478 = vadd.f32 %v472, %v477
        %v479 = vtanh.pop %v478
        %v480 = vmul.f32 %v478, 0.5
        %v481 = vtanh.pop %v480
        %v482 = vadd.f32 %v481, 1.0
        %v483 = vmul.f32 %v482, 0.5
        %485 = vrot.lane.b32.xlu0 %v483, 124
        %v486 = vpop.permute.xlu0 %485
        %v488 = vmul.f32 %v479, %v486
        %490 = vrot.lane.b32.xlu0 %v488, 4
        %v491 = vpop.permute.xlu0 %490
        %493 = vst.msk [vmem:[#allocation2 + $0x8] sm:$0xff] %vm362, %v491
        %494 = vrot.lane.b32.xlu0 %v488, 8
        %v495 = vpop.permute.xlu0 %494
        %vm497 = vcmask 97344
        %498 = vst.msk [vmem:[%s215] sm:$0xff] %vm497, %v495
        %v499 = vld [vmem:[#allocation2] sm:$0xff]
        %v500 = vld [vmem:[#allocation2 + $0x8] sm:$0xff]
        %v501 = vld [vmem:[%s4] sm:$0xff]
        %v502 = vld [vmem:[%s4 + $0x8] sm:$0xff]
        %v503 = vld [vmem:[%s4 + $0x10] sm:$0xff]
        %v504 = vld [vmem:[%s4 + $0x18] sm:$0xff]
        %v505 = vld [vmem:[%s4 + $0x20] sm:$0xff]
        %v506 = vld [vmem:[%s4 + $0x28] sm:$0xff]
        %v507 = vld [vmem:[%s4 + $0x30] sm:$0xff]
        %v508 = vld [vmem:[%s4 + $0x38] sm:$0xff]
        %v509 = vld [vmem:[%s4 + $0x40] sm:$0xff]
        %v510 = vld [vmem:[%s4 + $0x48] sm:$0xff]
        %v511 = vld [vmem:[%s4 + $0x50] sm:$0xff]
        %v512 = vld [vmem:[%s4 + $0x58] sm:$0xff]
        %v513 = vld [vmem:[%s4 + $0x60] sm:$0xff]
        %v514 = vld [vmem:[%s4 + $0x68] sm:$0xff]
        %v515 = vld [vmem:[%s4 + $0x70] sm:$0xff]
        %v516 = vld [vmem:[%s4 + $0x78] sm:$0xff]
        %v517 = vld [vmem:[%s4 + $0x80] sm:$0xff]
        %v518 = vld [vmem:[%s1 + $0x2] sm:$0x1]
        %v519 = vlaneseq
        %v520 = vshrl.u32 %v519, 7
        %v521 = vsub.s32 0, %v520
        %v522 = vrot.slane %v518, %v521
        %vm523 = vcmask 64512
        %v525 = vsel %vm523, %v500, 0
        %527 = vmatprep.subr.mxu0 0.0
        %528 = vmatpush1.msra.mxu0 %v501
        %529 = vmatprep.subr.mxu0 0.0
        %530 = vmatpush1.msra.mxu0 %v502
        %531 = vmatprep.subr.mxu0 0.0
        %532 = vmatpush1.msra.mxu0 %v503
        %533 = vmatprep.subr.mxu0 0.0
        %534 = vmatpush1.msra.mxu0 %v504
        %535 = vmatprep.subr.mxu0 0.0
        %536 = vmatpush1.msra.mxu0 %v505
        %537 = vmatprep.subr.mxu0 0.0
        %538 = vmatpush1.msra.mxu0 %v506
        %539 = vmatprep.subr.mxu0 0.0
        %540 = vmatpush1.msra.mxu0 %v507
        %541 = vmatprep.subr.mxu0 0.0
        %542 = vmatpush1.msra.mxu0 %v508
        %543 = vmatprep.subr.mxu0 0.0
        %544 = vmatpush1.msra.mxu0 %v509
        %545 = vmatprep.subr.mxu0 0.0
        %546 = vmatpush1.msra.mxu0 %v510
        %547 = vmatprep.subr.mxu0 0.0
        %548 = vmatpush1.msra.mxu0 %v511
        %549 = vmatprep.subr.mxu0 0.0
        %550 = vmatpush1.msra.mxu0 %v512
        %551 = vmatprep.subr.mxu0 0.0
        %552 = vmatpush1.msra.mxu0 %v513
        %553 = vmatprep.subr.mxu0 0.0
        %554 = vmatpush1.msra.mxu0 %v514
        %555 = vmatprep.subr.mxu0 0.0
        %556 = vmatpush1.msra.mxu0 %v515
        %557 = vmatprep.subr.mxu0 0.0
        %558 = vmatpush1.msra.mxu0 %v516
        %559 = vmatprep.subr.mxu0 0.0
        %560 = vmatpush1.msra.mxu0 %v517
        %561 = vmatprep.subr.mxu0 0.0
        %562 = vmatpush1.msra.mxu0 0.0
        %563 = vmatprep.subr.mxu0 0.0
        %564 = vmatpush1.msra.mxu0 0.0
        %565 = vmatprep.subr.mxu0 0.0
        %566 = vmatpush1.msra.mxu0 0.0
        %567 = vmatprep.subr.mxu0 0.0
        %568 = vmatpush1.msra.mxu0 0.0
        %569 = vmatprep.subr.mxu0 0.0
        %570 = vmatpush1.msra.mxu0 0.0
        %571 = vmatprep.subr.mxu0 0.0
        %572 = vmatpush1.msra.mxu0 0.0
        %573 = vmatprep.subr.mxu0 0.0
        %574 = vmatpush1.msra.mxu0 0.0
        %575 = vmatprep.subr.mxu0 0.0
        %576 = vmatpush1.msra.mxu0 0.0
        %577 = vmatprep.subr.mxu0 0.0
        %578 = vmatpush1.msra.mxu0 0.0
        %579 = vmatprep.subr.mxu0 0.0
        %580 = vmatpush1.msra.mxu0 0.0
        %581 = vmatprep.subr.mxu0 0.0
        %582 = vmatpush1.msra.mxu0 0.0
        %583 = vmatprep.subr.mxu0 0.0
        %584 = vmatpush1.msra.mxu0 0.0
        %585 = vmatprep.subr.mxu0 0.0
        %586 = vmatpush1.msra.mxu0 0.0
        %587 = vmatprep.subr.mxu0 0.0
        %588 = vmatpush1.msra.mxu0 0.0
        %589 = vmatprep.subr.mxu0 0.0
        %590 = vmatpush1.msra.mxu0 0.0
        %591 = vmatprep.mubr.f32.mxu0 %v525
        %592 = vmatmul.mubr.f32.gmra.mrb[0].mxu0 %v499
        %v593 = vpop.f32.mrb[0].mxu0
        %v594 = vadd.f32 %v522, %v593
        %v595 = vpop.f32.mrb[0].mxu0
        %596 = vdwg.mxu0
        %v597 = vtanh.pop %v594
        %v598 = vmul.f32 %v594, 0.5
        %v599 = vtanh.pop %v598
        %v600 = vadd.f32 %v599, 1.0
        %v601 = vmul.f32 %v600, 0.5
        %603 = vrot.lane.b32.xlu0 %v601, 124
        %v604 = vpop.permute.xlu0 %603
        %v606 = vmul.f32 %v597, %v604
        %608 = vrot.lane.b32.xlu0 %v606, 8
        %v609 = vpop.permute.xlu0 %608
        %611 = vst.msk [vmem:[#allocation2 + $0x8] sm:$0xff] %vm497, %v609
        %612 = vrot.lane.b32.xlu0 %v606, 12
        %v613 = vpop.permute.xlu0 %612
        %vm615 = vcmask 130144
        %616 = vst.msk [vmem:[%s215] sm:$0xff] %vm615, %v613
        %s617 = sand.u32 %s137, 1
        %s618 = scalar_lea.sflag [#allocation4], %s617
        %s619 = sand.u32 %s137, 1
        %s620 = smul.addr %s619, 8
        %s621 = scalar_lea.vmem [#allocation3], %s620
        // Predicated region
        $region41: #{tpu_custom_call.1} parent=39 // pred_check
          %p622 = pneg %p147
        $region42: #{tpu_custom_call.1} parent=39 // pred_check_branch
          %624 = sbr.rel (%p622) target = $region44
        $region43: #{tpu_custom_call.1} parent=39 // pred_region
          %s626 = ssub.s32 128, 128
          %627 = vsyncadd %s618, %s626
          %s628 = smul.addr %s19, 128
          %s629 = scalar_lea.hbm %s5, %s628
          %s631 = sshll.u32 %s621, 4
          %s632 = int_to_ptr.vmem [resolvable:$true] %s631
          %634 = dma.vmem_to_hbm [thread:$0]  %s632, 128, %s629, %s618
        $region44: #{tpu_custom_call.1} parent=39 // pred_fallthru
          _
      $region40: #{tpu_custom_call.1} parent=5 // pred_fallthru
        _
      %p635 = scmp.le.s32.totalorder 2, %s14
      // Predicated region
      $region45: #{tpu_custom_call.1} parent=5 // pred_check
        %p636 = pneg %p635
      $region46: #{tpu_custom_call.1} parent=5 // pred_check_branch
        %638 = sbr.rel (%p636) target = $region48
      $region47: #{tpu_custom_call.1} parent=5 // pred_region
        %s639 = ssub.s32 %s14, 2
        // Predicated region
        $region49: #{tpu_custom_call.1} parent=47 // pred_check
          %p640 = pneg %p153
        $region50: #{tpu_custom_call.1} parent=47 // pred_check_branch
          %642 = sbr.rel (%p640) target = $region52
        $region51: #{tpu_custom_call.1} parent=47 // pred_region
          %s643 = sand.u32 %s138, 1
          %s644 = scalar_lea.sflag [#allocation4], %s643
          %s645 = sand.u32 %s138, 1
          %s646 = smul.addr %s645, 8
          %s647 = scalar_lea.vmem [#allocation3], %s646
          %648 = dma.done %s644, 128
        $region52: #{tpu_custom_call.1} parent=47 // pred_fallthru
          _
      $region48: #{tpu_custom_call.1} parent=5 // pred_fallthru
        _
    $region6: #{tpu_custom_call.1} parent=1 // loop_footer
      %s18 = sadd.s32 1, %s14
    $region7: #{tpu_custom_call.1} parent=1 // loop_footer_branch
      %13 = sbr.rel target = $region3
    $region8: #{tpu_custom_call.1} parent=1 // loop_exit
      _
    %649 = vsyncpa [#allocation4], 1
    %s650 = scalar_lea.sflag [#allocation4], 1
    %651 = vsyncpa %s650, 1

</llo_original>
